<compile_context>
chip_gen: v7x
topology: tpu7x:2x2x1
jax: 0.10.0
libtpu: 0.0.40
codegen_flags: <defaults>
</compile_context>

<pallas_src>
import functools
import numpy as np
import jax
import jax.numpy as jnp
from jax import lax
from jax.experimental import pallas as pl
from jax.experimental.pallas import tpu as pltpu


def _round_up(x, m):
    return ((x + m - 1) // m) * m


def _calibrated_ce_kernel(x_ref, beta_ref, tgt_ref, out_ref, acc_ref, *, true_b):
    i = pl.program_id(0)

    @pl.when(i == 0)
    def _():
        acc_ref[...] = jnp.zeros_like(acc_ref)

    # Cast in-vreg (keep x in its native dtype in HBM).
    logits = x_ref[...].astype(jnp.float32) + beta_ref[...]          # (TB, C)
    tb, c = logits.shape

    # Numerically stable log-sum-exp; reuse the shifted intermediate for the
    # picked logit so (lse - picked) = log(sumexp) - picked_shifted (m cancels).
    m = jnp.max(logits, axis=-1, keepdims=True)                      # (TB, 1)
    shifted = logits - m                                             # (TB, C)
    sumexp = jnp.sum(jnp.exp(shifted), axis=-1, keepdims=True)       # (TB, 1)

    class_ids = lax.broadcasted_iota(jnp.int32, (tb, c), 1)          # (TB, C)
    onehot = class_ids == tgt_ref[...]                               # (TB, C)
    picked_shifted = jnp.sum(jnp.where(onehot, shifted, 0.0),
                             axis=-1, keepdims=True)                 # (TB, 1)

    loss_rows = jnp.log(sumexp) - picked_shifted                     # (TB, 1)

    # Mask padded rows (when B is not a multiple of the batch tile).
    row_ids = i * tb + lax.broadcasted_iota(jnp.int32, (tb, 1), 0)
    loss_rows = jnp.where(row_ids < true_b, loss_rows, 0.0)

    acc_ref[...] += jnp.sum(loss_rows, keepdims=True)                # (1, 1)

    @pl.when(i == pl.num_programs(0) - 1)
    def _():
        out_ref[...] = acc_ref[...] * jnp.float32(1.0 / true_b)


def calibrated_ce(x, beta_classwise, target, *, tile_b=None):
    """x: (B, C) f32/bf16, beta_classwise: (C,) f32, target: (B,) int -> scalar loss."""
    B, C = x.shape
    itemsize = jnp.dtype(x.dtype).itemsize

    if tile_b is None:
        # ~2 MiB x-tile (double-buffered by the pipeline), sublane-aligned.
        tile_b = max(8, min(1024, ((2 << 20) // max(1, C * itemsize)) // 8 * 8))
    tile_b = max(8, (tile_b // 8) * 8)
    tile_b = min(tile_b, _round_up(B, 8))

    B_pad = _round_up(B, tile_b)
    num_blocks = B_pad // tile_b

    if B_pad != B:
        x = jnp.pad(x, ((0, B_pad - B), (0, 0)))
        target = jnp.pad(target, (0, B_pad - B))

    beta2d = beta_classwise.reshape(1, C).astype(jnp.float32)
    tgt2d = target.reshape(B_pad, 1).astype(jnp.int32)

    kernel = functools.partial(_calibrated_ce_kernel, true_b=B)

    cost = pl.CostEstimate(
        flops=int(5 * B * C),
        transcendentals=int(B * C),
        bytes_accessed=int(B * C * itemsize + C * 4 + B * 4 + 4),
    )

    out = pl.pallas_call(
        kernel,
        out_shape=jax.ShapeDtypeStruct((1, 1), jnp.float32),
        grid_spec=pltpu.PrefetchScalarGridSpec(
            num_scalar_prefetch=0,
            grid=(num_blocks,),
            in_specs=[
                pl.BlockSpec((tile_b, C), lambda i: (i, 0)),   # x tile
                pl.BlockSpec((1, C), lambda i: (0, 0)),        # beta (resident)
                pl.BlockSpec((tile_b, 1), lambda i: (i, 0)),   # targets
            ],
            out_specs=pl.BlockSpec((1, 1), lambda i: (0, 0)),  # resident accumulator out
            scratch_shapes=[pltpu.VMEM((1, 1), jnp.float32)],
        ),
        compiler_params=pltpu.CompilerParams(
            dimension_semantics=("arbitrary",),   # reduction over batch tiles
            vmem_limit_bytes=32 * 1024 * 1024,
        ),
        cost_estimate=cost,
    )(x, beta2d, tgt2d)
    return out[0, 0]


def make_beta_classwise(cls_num_list, num_old, num_all):
    """Deterministic replication of calibratedCE.__init__ (alpha is unused in forward)."""
    beta = num_old * [cls_num_list[0] / sum(cls_num_list)] + (num_all - num_old) * [1.0]
    beta_classwise = np.log(np.asarray(beta, dtype=np.float64)).astype(np.float32)
    return jnp.asarray(beta_classwise)


if __name__ == "__main__":
    # Small, deterministic configuration consistent with the module.
    num_all = 32          # total number of classes (= logit dim C)
    num_old = 16          # number of "old" classes
    batch = 8

    cls_num_list = [int(100 - 2 * i) for i in range(num_all)]  # 100, 98, ..., 38
    beta_classwise = make_beta_classwise(cls_num_list, num_old, num_all)

    key = jax.random.PRNGKey(0)
    kx, kt = jax.random.split(key)
    x = jax.random.normal(kx, (batch, num_all), dtype=jnp.float32)
    target = jax.random.randint(kt, (batch,), 0, num_all, dtype=jnp.int32)

    loss = calibrated_ce(x, beta_classwise, target)
    jax.block_until_ready(loss)

    # Pure-JAX reference check.
    logits_ref = x + beta_classwise[None, :]
    lse_ref = jax.nn.logsumexp(logits_ref, axis=-1)
    picked_ref = jnp.take_along_axis(logits_ref, target[:, None], axis=-1)[:, 0]
    loss_ref = jnp.mean(lse_ref - picked_ref)
    assert jnp.allclose(loss, loss_ref, atol=1e-5, rtol=1e-5), (loss, loss_ref)

    # Exercise the tiled/masked path: B not a multiple of the tile, bf16 input.
    B2, C2 = 300, 256
    x2 = jax.random.normal(kx, (B2, C2), dtype=jnp.bfloat16)
    beta2 = jnp.log(jnp.linspace(0.1, 1.0, C2)).astype(jnp.float32)
    tgt2 = jax.random.randint(kt, (B2,), 0, C2, dtype=jnp.int32)
    loss2 = calibrated_ce(x2, beta2, tgt2, tile_b=128)
    jax.block_until_ready(loss2)

    logits2 = x2.astype(jnp.float32) + beta2[None, :]
    lse2 = jax.nn.logsumexp(logits2, axis=-1)
    picked2 = jnp.take_along_axis(logits2, tgt2[:, None], axis=-1)[:, 0]
    loss2_ref = jnp.mean(lse2 - picked2)
    assert jnp.allclose(loss2, loss2_ref, atol=1e-4, rtol=1e-4), (loss2, loss2_ref)

    print("KERNEL_OK")
</pallas_src>

<mosaic_0001>
module attributes {stable_mosaic.version = 11 : i64} {
  func.func @_calibrated_ce_kernel(%arg0: i32, %arg1: memref<8x32xf32, #tpu.memory_space<vmem>>, %arg2: memref<1x32xf32, #tpu.memory_space<vmem>>, %arg3: memref<8x1xi32, #tpu.memory_space<vmem>>, %arg4: memref<1x1xf32, #tpu.memory_space<vmem>>, %arg5: memref<1x1xf32, #tpu.memory_space<vmem>>) attributes {dimension_semantics = [#tpu.dimension_semantics<arbitrary>], iteration_bounds = array<i64: 1>, scalar_prefetch = 0 : i64, scratch_operands = 1 : i64, tpu.core_type = #tpu.core_type<tc>, window_params = [{transform_indices = @transform_0, window_bounds = array<i64: 8, 32>}, {pipeline_mode = #tpu.pipeline_mode<synchronous>, transform_indices = @transform_1, window_bounds = array<i64: 1, 32>}, {transform_indices = @transform_2, window_bounds = array<i64: 8, 1>}, {pipeline_mode = #tpu.pipeline_mode<synchronous>, transform_indices = @transform_3, window_bounds = array<i64: 1, 1>}]} {
    %c0_i32 = arith.constant 0 : i32
    %0 = arith.cmpi eq, %arg0, %c0_i32 : i32
    %1 = arith.extui %0 : i1 to i32
    %c0_i32_0 = arith.constant 0 : i32
    %2 = arith.cmpi ne, %1, %c0_i32_0 : i32
    scf.if %2 {
      %cst_18 = arith.constant 0.000000e+00 : f32
      %43 = vector.broadcast %cst_18 : f32 to vector<1x1xf32>
      %c0_19 = arith.constant 0 : index
      %c0_20 = arith.constant 0 : index
      %44 = vector.load %arg5[%c0_19, %c0_20] : memref<1x1xf32, #tpu.memory_space<vmem>>, vector<1x1xf32>
      tpu.vector_store %arg5[%c0_19, %c0_20], %43 {strides = array<i32>} : memref<1x1xf32, #tpu.memory_space<vmem>>, vector<1x1xf32>,
    } else {
    }
    %c0 = arith.constant 0 : index
    %c0_1 = arith.constant 0 : index
    %3 = vector.load %arg1[%c0, %c0_1] : memref<8x32xf32, #tpu.memory_space<vmem>>, vector<8x32xf32>
    %c0_2 = arith.constant 0 : index
    %c0_3 = arith.constant 0 : index
    %4 = vector.load %arg2[%c0_2, %c0_3] : memref<1x32xf32, #tpu.memory_space<vmem>>, vector<1x32xf32>
    %5 = vector.broadcast %4 : vector<1x32xf32> to vector<8x32xf32>
    %6 = arith.addf %3, %5 : vector<8x32xf32>
    %cst = arith.constant dense<0xFF800000> : vector<8xf32>
    %7 = vector.multi_reduction <maximumf>, %6, %cst [1] : vector<8x32xf32> to vector<8xf32>
    %8 = vector.shape_cast %7 : vector<8xf32> to vector<8x1xf32>
    %9 = vector.broadcast %8 : vector<8x1xf32> to vector<8x32xf32>
    %10 = arith.subf %6, %9 : vector<8x32xf32>
    %11 = math.exp %10 : vector<8x32xf32>
    %cst_4 = arith.constant dense<0.000000e+00> : vector<8xf32>
    %12 = vector.multi_reduction <add>, %11, %cst_4 [1] : vector<8x32xf32> to vector<8xf32>
    %13 = vector.shape_cast %12 : vector<8xf32> to vector<8x1xf32>
    %14 = tpu.iota {dimensions = array<i32: 1>} : vector<8x32xi32>
    %c0_5 = arith.constant 0 : index
    %c0_6 = arith.constant 0 : index
    %15 = vector.load %arg3[%c0_5, %c0_6] : memref<8x1xi32, #tpu.memory_space<vmem>>, vector<8x1xi32>
    %16 = vector.broadcast %15 : vector<8x1xi32> to vector<8x32xi32>
    %17 = arith.cmpi eq, %14, %16 : vector<8x32xi32>
    %cst_7 = arith.constant 0.000000e+00 : f32
    %18 = vector.broadcast %cst_7 : f32 to vector<8x32xf32>
    %19 = arith.select %17, %10, %18 : vector<8x32xi1>, vector<8x32xf32>
    %cst_8 = arith.constant dense<0.000000e+00> : vector<8xf32>
    %20 = vector.multi_reduction <add>, %19, %cst_8 [1] : vector<8x32xf32> to vector<8xf32>
    %21 = vector.shape_cast %20 : vector<8xf32> to vector<8x1xf32>
    %22 = math.log %13 : vector<8x1xf32>
    %23 = arith.subf %22, %21 : vector<8x1xf32>
    %c8_i32 = arith.constant 8 : i32
    %24 = arith.muli %arg0, %c8_i32 : i32
    %25 = tpu.iota {dimensions = array<i32: 0>} : vector<8x1xi32>
    %26 = vector.broadcast %24 : i32 to vector<8x1xi32>
    %27 = arith.addi %26, %25 : vector<8x1xi32>
    %c8_i32_9 = arith.constant 8 : i32
    %28 = vector.broadcast %c8_i32_9 : i32 to vector<8x1xi32>
    %29 = arith.cmpi slt, %27, %28 : vector<8x1xi32>
    %cst_10 = arith.constant 0.000000e+00 : f32
    %30 = vector.broadcast %cst_10 : f32 to vector<8x1xf32>
    %31 = arith.select %29, %23, %30 : vector<8x1xi1>, vector<8x1xf32>
    %c0_11 = arith.constant 0 : index
    %c0_12 = arith.constant 0 : index
    %32 = vector.load %arg5[%c0_11, %c0_12] : memref<1x1xf32, #tpu.memory_space<vmem>>, vector<1x1xf32>
    %33 = vector.shape_cast %31 : vector<8x1xf32> to vector<1x8x1xf32>
    %cst_13 = arith.constant dense<0.000000e+00> : vector<1xf32>
    %34 = vector.multi_reduction <add>, %33, %cst_13 [1, 2] : vector<1x8x1xf32> to vector<1xf32>
    %35 = vector.shape_cast %34 : vector<1xf32> to vector<1x1x1xf32>
    %36 = vector.extract %35[0, 0, 0] : f32 from vector<1x1x1xf32>
    %37 = vector.broadcast %36 : f32 to vector<1x1xf32>
    %38 = arith.addf %32, %37 : vector<1x1xf32>
    %c0_14 = arith.constant 0 : index
    %c0_15 = arith.constant 0 : index
    %39 = vector.load %arg5[%c0_14, %c0_15] : memref<1x1xf32, #tpu.memory_space<vmem>>, vector<1x1xf32>
    tpu.vector_store %arg5[%c0_14, %c0_15], %38 {strides = array<i32>} : memref<1x1xf32, #tpu.memory_space<vmem>>, vector<1x1xf32>,
    %c0_i32_16 = arith.constant 0 : i32
    %40 = arith.cmpi eq, %arg0, %c0_i32_16 : i32
    %41 = arith.extui %40 : i1 to i32
    %c0_i32_17 = arith.constant 0 : i32
    %42 = arith.cmpi ne, %41, %c0_i32_17 : i32
    scf.if %42 {
      %c0_18 = arith.constant 0 : index
      %c0_19 = arith.constant 0 : index
      %43 = vector.load %arg5[%c0_18, %c0_19] : memref<1x1xf32, #tpu.memory_space<vmem>>, vector<1x1xf32>
      %cst_20 = arith.constant 1.250000e-01 : f32
      %44 = vector.broadcast %cst_20 : f32 to vector<1x1xf32>
      %45 = arith.mulf %43, %44 : vector<1x1xf32>
      %c0_21 = arith.constant 0 : index
      %c0_22 = arith.constant 0 : index
      %46 = vector.load %arg4[%c0_21, %c0_22] : memref<1x1xf32, #tpu.memory_space<vmem>>, vector<1x1xf32>
      tpu.vector_store %arg4[%c0_21, %c0_22], %45 {strides = array<i32>} : memref<1x1xf32, #tpu.memory_space<vmem>>, vector<1x1xf32>,
    } else {
    }
    return
  }
  func.func @transform_0(%arg0: i32) -> (i32, i32) {
    %c0_i32 = arith.constant 0 : i32
    %c0_i32_0 = arith.constant 0 : i32
    return %arg0, %c0_i32 : i32, i32
  }
  func.func @transform_1(%arg0: i32) -> (i32, i32) {
    %c0_i32 = arith.constant 0 : i32
    %c0_i32_0 = arith.constant 0 : i32
    %c0_i32_1 = arith.constant 0 : i32
    return %c0_i32, %c0_i32_0 : i32, i32
  }
  func.func @transform_2(%arg0: i32) -> (i32, i32) {
    %c0_i32 = arith.constant 0 : i32
    %c0_i32_0 = arith.constant 0 : i32
    return %arg0, %c0_i32 : i32, i32
  }
  func.func @transform_3(%arg0: i32) -> (i32, i32) {
    %c0_i32 = arith.constant 0 : i32
    %c0_i32_0 = arith.constant 0 : i32
    %c0_i32_1 = arith.constant 0 : i32
    return %c0_i32, %c0_i32_0 : i32, i32
  }
}

</mosaic_0001>

<llo_original>
// kernel: tpu_custom_call.1
$region0: #{tpu_custom_call.1}
  #allocation0 [shape = 'u32[]', space=smem, size = 0x4, offset = 0x4, fixed_abs, tag = 'smem constant byte address 0x4 - core index']
  #allocation1 [shape = 'u32[144,128]{1,0:T(1,128)}', space=vmem, size = 0x12000, scoped, tag = 'internal scratch']
  #allocation2 [shape = 'f32[1,1]{1,0:T(1,128)}', space=vmem, size = 0x200, scoped, tag = 'scratch operand']
  %s0 = inlined_call_operand.vmem [shape: f32[8,32], index: 0, kind: input, shape index: {}]
  %s1 = inlined_call_operand.vmem [shape: f32[1,32], index: 1, kind: input, shape index: {}]
  %s2 = inlined_call_operand.vmem [shape: s32[8,1], index: 2, kind: input, shape index: {}]
  %s3 = inlined_call_operand.hbm [shape: f32[1,1], index: 3, kind: output, shape index: {}]
  %s4 = sld [smem:[#allocation0]]
  $region30: #{tpu_custom_call.1} parent=0
    _
  %s6 = ssub.s32 1, %s4
  %s7 = scalar_select 0, %s6, %s4
  $region1: #{tpu_custom_call.1} parent=0
    #allocation3 [shape = 'u8[512]{0}', space=vmem, size = 0x400, scoped, tag = 'output window, operand 0, single buffered']
    #allocation4 [shape = 's32[1]{0}', space=sflag, size = 0x4, scoped, tag = 'scoped memory for tpu_custom_call.1']
    %8 = vsyncpa [#allocation4], 0
    // Predicated region
    $region2: #{tpu_custom_call.1} parent=1 // pred_check
      _
    $region3: #{tpu_custom_call.1} parent=1 // pred_check_branch
      %10 = sbr.rel (0) target = $region5
    $region4: #{tpu_custom_call.1} parent=1 // pred_region
      _
    $region5: #{tpu_custom_call.1} parent=1 // pred_fallthru
      _
    // Predicated region
    $region6: #{tpu_custom_call.1} parent=1 // pred_check
      _
    $region7: #{tpu_custom_call.1} parent=1 // pred_check_branch
      %12 = sbr.rel (0) target = $region9
    $region8: #{tpu_custom_call.1} parent=1 // pred_region
      _
    $region9: #{tpu_custom_call.1} parent=1 // pred_fallthru
      _
    // Predicated region
    $region10: #{tpu_custom_call.1} parent=1 // pred_check
      _
    $region11: #{tpu_custom_call.1} parent=1 // pred_check_branch
      %14 = sbr.rel (0) target = $region13
    $region12: #{tpu_custom_call.1} parent=1 // pred_region
      _
    $region13: #{tpu_custom_call.1} parent=1 // pred_fallthru
      _
    %p15 = scmp.eq.s32.totalorder 0, 0
    // Predicated region
    $region14: #{tpu_custom_call.1} parent=1 // pred_check
      %p16 = pneg %p15
    $region15: #{tpu_custom_call.1} parent=1 // pred_check_branch
      %18 = sbr.rel (%p16) target = $region17
    $region16: #{tpu_custom_call.1} parent=1 // pred_region
      %vm19 = vcmask 0
      %20 = vst.msk [vmem:[#allocation2] sm:$0x1] %vm19, 0.0
    $region17: #{tpu_custom_call.1} parent=1 // pred_fallthru
      _
    %v21 = vld [vmem:[%s0] sm:$0xff]
    %v22 = vld [vmem:[%s1] sm:$0x1]
    %v24 = vlaneseq
    %v25 = vshrl.u32 %v24, 7
    %v26 = vsub.s32 0, %v25
    %v27 = vrot.slane %v22, %v26
    %v29 = vadd.f32 %v21, %v27
    %vm30 = vcmask 261120
    %v31 = vsel %vm30, %v29, -inf
    %32 = vmax.xlane.f32.xlu0 %v31
    %v33 = vpop.xlane.xlu0 %32
    %v34 = vsub.f32 %v29, %v33
    %v35 = vmul.f32 %v34, 1.442695
    %v36 = vpow.pop %v35
    %v37 = vsel %vm30, %v36, 0.0
    %38 = vadd.xlane.f32.xlu0 %v37
    %v39 = vpop.xlane.xlu0 %38
    %v40 = vlaneseq
    %v41 = vand.u32 %v40, 127
    %v42 = vld [vmem:[%s2] sm:$0xff]
    %43 = vset.pattern.permute.xlu0 0
    %44 = vperm.xlu0 %43, %v42
    %v45 = vpop.permute.xlu0 %44
    %vm46 = vcmp.eq.s32.totalorder %v41, %v45
    %v47 = vsel %vm46, %v34, 0.0
    %v48 = vsel %vm30, %v47, 0.0
    %49 = vadd.xlane.f32.xlu0 %v48
    %v50 = vpop.xlane.xlu0 %49
    %v51 = vlog2.pop %v39
    %v52 = vmul.f32 %v51, 0.6931472
    %v53 = vsub.f32 %v52, %v50
    %s54 = smul.u32 0, 8
    %v55 = vlaneseq
    %v56 = vshrl.u32 %v55, 7
    %v57 = vstv %s54
    %v58 = vadd.s32 %v57, %v56
    %vm59 = vcmp.lt.s32.totalorder %v58, 8
    %v60 = vsel %vm59, %v53, 0.0
    %v61 = vld [vmem:[#allocation2] sm:$0x1]
    %vm62 = vcmask 7168
    %v63 = vsel %vm62, %v60, 0.0
    %64 = vadd.xlane.f32.xlu0 %v63
    %v65 = vpop.xlane.xlu0 %64
    %v66 = vrot.slane %v65, 4
    %v67 = vadd.f32 %v65, %v66
    %v68 = vrot.slane %v67, 2
    %v69 = vadd.f32 %v67, %v68
    %v70 = vrot.slane %v69, 1
    %v71 = vadd.f32 %v69, %v70
    %s72 = vtos %v71
    %v73 = vstv %s72
    %v74 = vadd.f32 %v61, %v73
    %vm75 = vcmask 0
    %76 = vst.msk [vmem:[#allocation2] sm:$0x1] %vm75, %v74
    // Predicated region
    $region18: #{tpu_custom_call.1} parent=1 // pred_check
      %p77 = pneg %p15
    $region19: #{tpu_custom_call.1} parent=1 // pred_check_branch
      %79 = sbr.rel (%p77) target = $region21
    $region20: #{tpu_custom_call.1} parent=1 // pred_region
      %v80 = vld [vmem:[#allocation2] sm:$0x1]
      %v81 = vmul.f32 %v80, 0.125
      %82 = vst.msk [vmem:[#allocation3] sm:$0x1] %vm75, %v81
    $region21: #{tpu_custom_call.1} parent=1 // pred_fallthru
      _
    // Predicated region
    $region22: #{tpu_custom_call.1} parent=1 // pred_check
      _
    $region23: #{tpu_custom_call.1} parent=1 // pred_check_branch
      %84 = sbr.rel (0) target = $region25
    $region24: #{tpu_custom_call.1} parent=1 // pred_region
      %s86 = ssub.s32 16, 16
      %87 = vsyncadd [#allocation4], %s86
      %s89 = sshll.u32 [#allocation3], 4
      %s90 = int_to_ptr.vmem [resolvable:$true] %s89
      %92 = dma.vmem_to_hbm [thread:$0]  %s90, 16, %s3, [#allocation4]
    $region25: #{tpu_custom_call.1} parent=1 // pred_fallthru
      _
    // Predicated region
    $region26: #{tpu_custom_call.1} parent=1 // pred_check
      _
    $region27: #{tpu_custom_call.1} parent=1 // pred_check_branch
      %94 = sbr.rel (0) target = $region29
    $region28: #{tpu_custom_call.1} parent=1 // pred_region
      %95 = dma.done [#allocation4], 16
    $region29: #{tpu_custom_call.1} parent=1 // pred_fallthru
      _
    %96 = vsyncpa [#allocation4], 1

</llo_original>
